<compile_context>
chip_gen: v7x
topology: tpu7x:2x2x1
jax: 0.10.0
libtpu: 0.0.40
codegen_flags: <defaults>
</compile_context>

<pallas_src>
import math

import jax
import jax.numpy as jnp
from jax.experimental import pallas as pl
from jax.experimental.pallas import tpu as pltpu


def _masked_mul_kernel(x_ref, m_ref, o_ref):
    # x_ref: [TB, TL], m_ref: [1, TL] -> broadcast multiply; pure streaming VPU.
    o_ref[...] = x_ref[...] * m_ref[...]


def _build_mask(h, w, radius, dtype):
    """Flat [1, (h*w)**2] locality mask, identical to MaskedAttention.make()."""
    gx, gy = jnp.meshgrid(jnp.arange(h), jnp.arange(w), indexing="ij")
    d2 = ((gx[None, None] - gx[:, :, None, None]) ** 2
          + (gy[None, None] - gy[:, :, None, None]) ** 2).astype(jnp.float32)
    mask = (jnp.sqrt(d2) < radius).astype(dtype)          # [h, w, h, w]
    return mask.reshape(1, (h * w) * (h * w))             # [1, N*N]


def masked_attention(x, radius, flat=True):
    """Pallas implementation of MaskedAttention.forward (flat=True layout)."""
    if not flat:
        # TODO(synk): the PyTorch flat=False path only broadcasts for degenerate
        # 1x1 spatial shapes; not implemented here.
        raise NotImplementedError("flat=False is not supported")

    B, C, H, W = x.shape
    n = math.isqrt(H)                         # exact integer sqrt (no FP truncation)
    assert H == W and n * n == H, "flat=True requires square, perfect-square spatial dims"
    h = w = n

    BC = B * C
    L = H * W                                 # = N*N, lane-dense last dim
    itemsize = jnp.dtype(x.dtype).itemsize

    # ---- tile selection ------------------------------------------------------
    LANE_TARGET_BYTES = 2 * 1024 * 1024       # per-row lane chunk
    BLOCK_TARGET_BYTES = 4 * 1024 * 1024      # per x block; in+out double-buffered
                                              # => ~4x this resident in VMEM (< 24 MiB)
    TL = L
    if L * itemsize > LANE_TARGET_BYTES and L % 128 == 0:
        cand = (LANE_TARGET_BYTES // itemsize // 128) * 128
        while cand >= 128:
            if L % cand == 0:
                TL = cand
                break
            cand -= 128

    row_bytes = TL * itemsize
    TB = min(BC, max(1, BLOCK_TARGET_BYTES // row_bytes))
    if TB < BC and TB >= 8:
        TB = (TB // 8) * 8                    # keep sublane dim a multiple of 8
    n_row = pl.cdiv(BC, TB)
    n_col = pl.cdiv(L, TL)

    xf = x.reshape(BC, L)
    mask = _build_mask(h, w, float(radius), x.dtype)      # [1, L]

    out = pl.pallas_call(
        _masked_mul_kernel,
        out_shape=jax.ShapeDtypeStruct((BC, L), x.dtype),
        # Column axis first so the mask's block index is constant over the
        # inner (row) loop and its DMA is skipped on revisits.
        grid=(n_col, n_row),
        in_specs=[
            pl.BlockSpec((TB, TL), lambda c, r: (r, c)),
            pl.BlockSpec((1, TL), lambda c, r: (0, c)),
        ],
        out_specs=pl.BlockSpec((TB, TL), lambda c, r: (r, c)),
        compiler_params=pltpu.CompilerParams(
            dimension_semantics=("parallel", "parallel"),
            vmem_limit_bytes=32 * 1024 * 1024,
        ),
        cost_estimate=pl.CostEstimate(
            flops=BC * L,
            transcendentals=0,
            bytes_accessed=(2 * BC * L + L) * itemsize,
        ),
    )(xf, mask)
    return out.reshape(B, C, H, W)


def _reference(x, radius, flat=True):
    """Pure-JAX reference mirroring the PyTorch module."""
    B, C, H, W = x.shape
    h = w = math.isqrt(H) if flat else H
    gx, gy = jnp.meshgrid(jnp.arange(h), jnp.arange(w), indexing="ij")
    D = ((gx[None, None] - gx[:, :, None, None]) ** 2
         + (gy[None, None] - gy[:, :, None, None]) ** 2).astype(jnp.float32) ** 0.5
    mask = (D < radius).astype(x.dtype).reshape(h * w, h * w)
    return x * mask


if __name__ == "__main__":
    key = jax.random.PRNGKey(0)
    B, C, S = 2, 4, 16            # spatial already flattened: S = 4*4
    radius = 2.1                  # MaskedAttention(radius=2.1, flat=True)
    x = jax.random.normal(key, (B, C, S, S), dtype=jnp.float32)

    out = jax.block_until_ready(masked_attention(x, radius, flat=True))

    ref = _reference(x, radius, flat=True)
    assert out.shape == x.shape and out.dtype == x.dtype
    assert jnp.allclose(out, ref, atol=1e-6, rtol=1e-6), "mismatch vs reference"
    print("KERNEL_OK")
</pallas_src>

<mosaic_0001>
module attributes {stable_mosaic.version = 11 : i64} {
  func.func @_masked_mul_kernel(%arg0: i32, %arg1: i32, %arg2: memref<8x256xf32, #tpu.memory_space<vmem>>, %arg3: memref<1x256xf32, #tpu.memory_space<vmem>>, %arg4: memref<8x256xf32, #tpu.memory_space<vmem>>) attributes {dimension_semantics = [#tpu.dimension_semantics<parallel>, #tpu.dimension_semantics<parallel>], iteration_bounds = array<i64: 1, 1>, scalar_prefetch = 0 : i64, scratch_operands = 0 : i64, tpu.core_type = #tpu.core_type<tc>, window_params = [{transform_indices = @transform_0, window_bounds = array<i64: 8, 256>}, {transform_indices = @transform_1, window_bounds = array<i64: 1, 256>}, {transform_indices = @transform_2, window_bounds = array<i64: 8, 256>}]} {
    %c0 = arith.constant 0 : index
    %c0_0 = arith.constant 0 : index
    %0 = vector.load %arg2[%c0, %c0_0] : memref<8x256xf32, #tpu.memory_space<vmem>>, vector<8x256xf32>
    %c0_1 = arith.constant 0 : index
    %c0_2 = arith.constant 0 : index
    %1 = vector.load %arg3[%c0_1, %c0_2] : memref<1x256xf32, #tpu.memory_space<vmem>>, vector<1x256xf32>
    %2 = vector.broadcast %1 : vector<1x256xf32> to vector<8x256xf32>
    %3 = arith.mulf %0, %2 : vector<8x256xf32>
    %c0_3 = arith.constant 0 : index
    %c0_4 = arith.constant 0 : index
    %4 = vector.load %arg4[%c0_3, %c0_4] : memref<8x256xf32, #tpu.memory_space<vmem>>, vector<8x256xf32>
    tpu.vector_store %arg4[%c0_3, %c0_4], %3 {strides = array<i32>} : memref<8x256xf32, #tpu.memory_space<vmem>>, vector<8x256xf32>,
    return
  }
  func.func @transform_0(%arg0: i32, %arg1: i32) -> (i32, i32) {
    %c0_i32 = arith.constant 0 : i32
    return %arg1, %arg0 : i32, i32
  }
  func.func @transform_1(%arg0: i32, %arg1: i32) -> (i32, i32) {
    %c0_i32 = arith.constant 0 : i32
    %c0_i32_0 = arith.constant 0 : i32
    return %c0_i32, %arg0 : i32, i32
  }
  func.func @transform_2(%arg0: i32, %arg1: i32) -> (i32, i32) {
    %c0_i32 = arith.constant 0 : i32
    return %arg1, %arg0 : i32, i32
  }
}

</mosaic_0001>

<llo_original>
// kernel: tpu_custom_call.1
$region0: #{tpu_custom_call.1}
  #allocation0 [shape = 'u32[]', space=smem, size = 0x4, offset = 0x4, fixed_abs, tag = 'smem constant byte address 0x4 - core index']
  #allocation1 [shape = 'u32[144,128]{1,0:T(1,128)}', space=vmem, size = 0x12000, scoped, tag = 'internal scratch']
  %s0 = inlined_call_operand.hbm [shape: f32[8,256], index: 0, kind: input, shape index: {}]
  %s1 = inlined_call_operand.vmem [shape: f32[1,256], index: 1, kind: input, shape index: {}]
  %s2 = inlined_call_operand.hbm [shape: f32[8,256], index: 2, kind: output, shape index: {}]
  %s3 = sld [smem:[#allocation0]]
  $region22: #{tpu_custom_call.1} parent=0
    _
  %s5 = ssub.s32 1, %s3
  %s6 = scalar_select 0, %s5, %s3
  $region1: #{tpu_custom_call.1} parent=0
    #allocation2 [shape = 'u8[8192]{0}', space=vmem, size = 0x2000, scoped, tag = 'input window, operand 0, single buffered']
    #allocation3 [shape = 's32[1]{0}', space=sflag, size = 0x4, scoped, tag = 'scoped memory for tpu_custom_call.1']
    #allocation4 [shape = 's32[1]{0}', space=sflag, size = 0x4, scoped, tag = 'scoped memory for tpu_custom_call.1']
    #allocation5 [shape = 'u8[8192]{0}', space=vmem, size = 0x2000, scoped, tag = 'output window, operand 0, single buffered']
    %7 = vsyncpa [#allocation3], 0
    %8 = vsyncpa [#allocation4], 0
    // Predicated region
    $region2: #{tpu_custom_call.1} parent=1 // pred_check
      _
    $region3: #{tpu_custom_call.1} parent=1 // pred_check_branch
      %10 = sbr.rel (0) target = $region5
    $region4: #{tpu_custom_call.1} parent=1 // pred_region
      %s12 = ssub.s32 256, 256
      %13 = vsyncadd [#allocation3], %s12
      %s15 = sshll.u32 [#allocation2], 4
      %s16 = int_to_ptr.vmem [resolvable:$true] %s15
      %18 = dma.hbm_to_vmem [thread:$0]  %s0, 256, %s16, [#allocation3]
    $region5: #{tpu_custom_call.1} parent=1 // pred_fallthru
      _
    // Predicated region
    $region6: #{tpu_custom_call.1} parent=1 // pred_check
      _
    $region7: #{tpu_custom_call.1} parent=1 // pred_check_branch
      %20 = sbr.rel (0) target = $region9
    $region8: #{tpu_custom_call.1} parent=1 // pred_region
      _
    $region9: #{tpu_custom_call.1} parent=1 // pred_fallthru
      _
    // Predicated region
    $region10: #{tpu_custom_call.1} parent=1 // pred_check
      _
    $region11: #{tpu_custom_call.1} parent=1 // pred_check_branch
      %22 = sbr.rel (0) target = $region13
    $region12: #{tpu_custom_call.1} parent=1 // pred_region
      %23 = dma.done [#allocation3], 256
    $region13: #{tpu_custom_call.1} parent=1 // pred_fallthru
      _
    %v24 = vld [vmem:[#allocation2] sm:$0xff]
    %v25 = vld [vmem:[#allocation2 + $0x8] sm:$0xff]
    %v26 = vld [vmem:[%s1] sm:$0x3]
    %v28 = vlaneseq
    %v29 = vshrl.u32 %v28, 7
    %v30 = vsub.s32 0, %v29
    %v31 = vrot.slane %v26, %v30
    %v32 = vlaneseq
    %v33 = vshrl.u32 %v32, 7
    %v34 = vsub.s32 1, %v33
    %v35 = vrot.slane %v26, %v34
    %v38 = vmul.f32 %v24, %v31
    %v39 = vmul.f32 %v25, %v35
    %40 = vst [vmem:[#allocation5] sm:$0xff] %v38
    %41 = vst [vmem:[#allocation5 + $0x8] sm:$0xff] %v39
    // Predicated region
    $region14: #{tpu_custom_call.1} parent=1 // pred_check
      _
    $region15: #{tpu_custom_call.1} parent=1 // pred_check_branch
      %43 = sbr.rel (0) target = $region17
    $region16: #{tpu_custom_call.1} parent=1 // pred_region
      %s45 = ssub.s32 256, 256
      %46 = vsyncadd [#allocation4], %s45
      %s48 = sshll.u32 [#allocation5], 4
      %s49 = int_to_ptr.vmem [resolvable:$true] %s48
      %51 = dma.vmem_to_hbm [thread:$0]  %s49, 256, %s2, [#allocation4]
    $region17: #{tpu_custom_call.1} parent=1 // pred_fallthru
      _
    // Predicated region
    $region18: #{tpu_custom_call.1} parent=1 // pred_check
      _
    $region19: #{tpu_custom_call.1} parent=1 // pred_check_branch
      %53 = sbr.rel (0) target = $region21
    $region20: #{tpu_custom_call.1} parent=1 // pred_region
      %54 = dma.done [#allocation4], 256
    $region21: #{tpu_custom_call.1} parent=1 // pred_fallthru
      _
    %55 = vsyncpa [#allocation3], 1
    %56 = vsyncpa [#allocation4], 1

</llo_original>
